<compile_context>
chip_gen: v7x
topology: tpu7x:2x2x1
jax: 0.10.0
libtpu: 0.0.40
codegen_flags: <defaults>
</compile_context>

<pallas_src>
import functools

import jax
import jax.numpy as jnp
from jax.experimental import pallas as pl
from jax.experimental.pallas import tpu as pltpu

NEG_SLOPE = 0.2      # GATConv default negative_slope
NEG_BIG = 1e30       # additive mask bias for non-edges
LANE = 128           # lane-padded width of hidden and class dims


# ---------------------------------------------------------------------------
# Fused kernel: conv1 -> ReLU -> (dropout = identity in eval) -> conv2
# grid = (2 phases, N // TM dst-row tiles)
# ---------------------------------------------------------------------------
def _fused_gat_kernel(x_ref, adj_ref, prm_ref, w1_ref, w2_ref, o_ref,
                      hsrc_ref, ssrc_ref, sdst_ref, h1_ref, *, tm):
    p = pl.program_id(0)   # 0: conv1 + ReLU, 1: conv2
    t = pl.program_id(1)   # destination-row tile

    prm = prm_ref[...]     # (8, 128) packed attention/bias params (one vreg)

    def stage_src(inp_bf16, w_ref, a_src, a_dst):
        # Per-src linear features + attention scalars for ALL nodes (once per phase).
        h = jnp.dot(inp_bf16, w_ref[...],
                    preferred_element_type=jnp.float32)                 # [N, 128] f32
        hsrc_ref[...] = h.astype(jnp.bfloat16)                          # MXU RHS for attn@h
        ssrc_ref[...] = jnp.einsum("ch,nh->cn", a_src, h,
                                   preferred_element_type=jnp.float32)  # [1, N]
        sdst_ref[...] = jnp.sum(h * a_dst, axis=-1, keepdims=True)      # [N, 1]

    @pl.when(jnp.logical_and(p == 0, t == 0))
    def _():  # layer 1 source features from x
        stage_src(x_ref[...].astype(jnp.bfloat16), w1_ref, prm[0:1], prm[1:2])

    @pl.when(jnp.logical_and(p == 1, t == 0))
    def _():  # layer 2 source features from relu(conv1(x)) scratch
        stage_src(h1_ref[...], w2_ref, prm[3:4], prm[4:5])

    # ------------------ per destination-row tile (both phases) ------------------
    row0 = pl.multiple_of(t * tm, tm)
    # additive mask: 0 where edge, -1e30 where no edge (int8 adjacency, no i32 expansion)
    adj_bias = (adj_ref[...].astype(jnp.float32) - 1.0) * NEG_BIG       # [TM, N]
    e = sdst_ref[pl.ds(row0, tm), :] + ssrc_ref[...]                    # [TM, N]
    e = jnp.where(e >= 0.0, e, NEG_SLOPE * e) + adj_bias                # LeakyReLU + mask
    m = jnp.max(e, axis=-1, keepdims=True)                              # finite (self-loops)
    w = jnp.exp(e - m)                                                  # non-edges -> exactly 0
    denom = jnp.sum(w, axis=-1, keepdims=True)
    attn = w * pl.reciprocal(denom, approx=True)                        # divide on EUP
    bias = jnp.where(p == 1, prm[5:6], prm[2:3])                        # b2 / b1 row
    out = jnp.dot(attn.astype(jnp.bfloat16), hsrc_ref[...],
                  preferred_element_type=jnp.float32) + bias            # [TM, 128]

    @pl.when(p == 0)
    def _():  # relu(conv1(x)) tile -> persistent scratch for phase 1
        h1_ref[pl.ds(row0, tm), :] = jnp.maximum(out, 0.0).astype(jnp.bfloat16)

    @pl.when(p == 1)
    def _():  # conv2 tile -> lane-dense output
        o_ref[...] = out


# ---------------------------------------------------------------------------
# Wrapper
# ---------------------------------------------------------------------------
def build_adj(edge_index, n):
    """Dense int8 adjacency (adj[dst, src] = 1), self-loops added. Build once per graph."""
    src, dst = edge_index[0], edge_index[1]
    adj = jnp.zeros((n, n), jnp.int8)
    adj = adj.at[dst, src].set(jnp.int8(1))            # edge src -> dst
    idx = jnp.arange(n)
    adj = adj.at[idx, idx].set(jnp.int8(1))            # self loops (GATConv default)
    return adj


def gat_convolution_forward(x, edge_index, prep, adj=None):
    n, f_in = x.shape
    if adj is None:  # fallback; prefer precomputing adj for static graphs
        adj = build_adj(edge_index, n)

    if n <= 256:
        tm = n                                         # single dst tile (toy sizes)
    else:
        tm = 256
        assert n % tm == 0  # TODO(synk): handle ragged final dst tile for general N
    nt = n // tm
    d = LANE

    flops = (2 * n * f_in * d + 4 * n * d + 3 * n * n + 2 * n * n * d) \
          + (2 * n * d * d + 4 * n * d + 3 * n * n + 2 * n * n * d)
    cost = pl.CostEstimate(
        flops=flops, transcendentals=2 * n * n + 2 * n,
        bytes_accessed=n * f_in * 4 + 2 * n * n + f_in * d * 2 + d * d * 2
                       + 8 * d * 4 + n * d * 4)

    vmem_est = (n * f_in * 4                    # x (resident)
                + 2 * tm * n                    # adj tile (int8, double-buffered)
                + f_in * d * 2 + d * d * 2      # bf16 weights
                + 8 * d * 4                     # packed params
                + 2 * tm * d * 4                # output tile (double-buffered)
                + 2 * n * d * 2                 # hsrc + h1 scratches (bf16)
                + n * d * 4 + 8 * n * 4         # sdst (lane-padded) + ssrc
                + 3 * tm * n * 4)               # f32 softmax intermediates
    vmem_limit = int(max(32 * 2**20, min(56 * 2**20, 2 * vmem_est)))

    kernel = functools.partial(_fused_gat_kernel, tm=tm)

    out_pad = pl.pallas_call(
        kernel,
        out_shape=jax.ShapeDtypeStruct((n, d), jnp.float32),
        grid=(2, nt),
        in_specs=[
            pl.BlockSpec((n, f_in), lambda p, t: (0, 0)),    # x        (resident)
            pl.BlockSpec((tm, n), lambda p, t: (t, 0)),      # adj rows (streamed per tile)
            pl.BlockSpec((8, d), lambda p, t: (0, 0)),       # packed attention/bias params
            pl.BlockSpec((f_in, d), lambda p, t: (0, 0)),    # w1 (bf16, resident)
            pl.BlockSpec((d, d), lambda p, t: (0, 0)),       # w2 (bf16, resident)
        ],
        # phase 0 never leaves block 0 (no garbage write-back); each block's only
        # write-back happens right after its phase-1 step writes it.
        out_specs=pl.BlockSpec((tm, d), lambda p, t: (p * t, 0)),
        scratch_shapes=[
            pltpu.VMEM((n, d), jnp.bfloat16),   # hsrc: current phase's per-src features
            pltpu.VMEM((1, n), jnp.float32),    # s_src (all nodes)
            pltpu.VMEM((n, 1), jnp.float32),    # s_dst (all nodes)
            pltpu.VMEM((n, d), jnp.bfloat16),   # h1 = relu(conv1(x)) (all nodes)
        ],
        compiler_params=pltpu.CompilerParams(
            dimension_semantics=("arbitrary", "arbitrary"),
            vmem_limit_bytes=vmem_limit),
        cost_estimate=cost,
    )(x, adj, prep["prm"], prep["w1"], prep["w2"])

    return out_pad[:, : prep["num_classes"]], edge_index


# ---------------------------------------------------------------------------
# Deterministic parameter init (synthetic; shapes follow GATConv, heads=1, concat=True)
# ---------------------------------------------------------------------------
def glorot(key, shape):
    fan_in, fan_out = shape[0], shape[-1]
    lim = (6.0 / (fan_in + fan_out)) ** 0.5
    return jax.random.uniform(key, shape, jnp.float32, -lim, lim)


def make_params(key, num_features, hidden, num_classes):
    ks = jax.random.split(key, 6)
    return {
        # conv1: lin weight [Fin, H], att_src/att_dst [1, H], bias [H]
        "w1": glorot(ks[0], (num_features, hidden)),
        "a1_src": glorot(ks[1], (1, hidden)),
        "a1_dst": glorot(ks[2], (1, hidden)),
        "b1": jnp.zeros((1, hidden), jnp.float32),
        # conv2: lin weight [H, C], att_src/att_dst [1, C], bias [C]
        "w2": glorot(ks[3], (hidden, num_classes)),
        "a2_src": glorot(ks[4], (1, num_classes)),
        "a2_dst": glorot(ks[5], (1, num_classes)),
        "b2": jnp.zeros((1, num_classes), jnp.float32),
    }


def prepare_params(params, num_classes, lane=LANE):
    """One-time host-side prep: lane-pad hidden AND class dims to 128 (zero padding => exact
    result), pre-cast weights to bf16 for the MXU, and pack the 6 tiny attention/bias vectors
    into a single (8, 128) f32 tile so they arrive in one DMA."""
    f_in, hidden = params["w1"].shape
    assert hidden <= lane and num_classes <= lane  # TODO(synk): multi-tile feature dims

    w1 = jnp.zeros((f_in, lane), jnp.float32).at[:, :hidden].set(params["w1"])
    w2 = jnp.zeros((lane, lane), jnp.float32).at[:hidden, :num_classes].set(params["w2"])

    prm = jnp.zeros((8, lane), jnp.float32)
    prm = prm.at[0, :hidden].set(params["a1_src"][0])       # row 0: a1_src
    prm = prm.at[1, :hidden].set(params["a1_dst"][0])       # row 1: a1_dst
    prm = prm.at[2, :hidden].set(params["b1"][0])           # row 2: b1
    prm = prm.at[3, :num_classes].set(params["a2_src"][0])  # row 3: a2_src
    prm = prm.at[4, :num_classes].set(params["a2_dst"][0])  # row 4: a2_dst
    prm = prm.at[5, :num_classes].set(params["b2"][0])      # row 5: b2

    return {
        "w1": w1.astype(jnp.bfloat16),   # [Fin, 128] bf16
        "w2": w2.astype(jnp.bfloat16),   # [128, 128] bf16
        "prm": prm,                      # [8, 128]  f32
        "num_classes": num_classes,
    }


if __name__ == "__main__":
    N, F_IN, HIDDEN, NUM_CLASSES, E = 16, 8, 32, 4, 48

    key = jax.random.PRNGKey(0)
    kx, ksrc, kdst, kparams = jax.random.split(key, 4)

    x = jax.random.normal(kx, (N, F_IN), jnp.float32)
    src = jax.random.randint(ksrc, (E,), 0, N)
    dst = jax.random.randint(kdst, (E,), 0, N)
    edge_index = jnp.stack([src, dst]).astype(jnp.int32)        # [2, E]

    params = make_params(kparams, F_IN, HIDDEN, NUM_CLASSES)
    prep = prepare_params(params, NUM_CLASSES)

    # Static graph: build the dense adjacency ONCE, outside the per-call path.
    adj = build_adj(edge_index, N)

    out, ei = gat_convolution_forward(x, edge_index, prep, adj=adj)
    out = jax.block_until_ready(out)

    assert out.shape == (N, NUM_CLASSES)
    assert ei.shape == (2, E)
    assert bool(jnp.all(jnp.isfinite(out)))
    print("KERNEL_OK")
</pallas_src>

<mosaic_0001>
module attributes {stable_mosaic.version = 11 : i64} {
  func.func @_fused_gat_kernel(%arg0: i32, %arg1: i32, %arg2: memref<16x8xf32, #tpu.memory_space<vmem>>, %arg3: memref<16x16xi8, #tpu.memory_space<vmem>>, %arg4: memref<8x128xf32, #tpu.memory_space<vmem>>, %arg5: memref<8x128xbf16, #tpu.memory_space<vmem>>, %arg6: memref<128x128xbf16, #tpu.memory_space<vmem>>, %arg7: memref<16x128xf32, #tpu.memory_space<vmem>>, %arg8: memref<16x128xbf16, #tpu.memory_space<vmem>>, %arg9: memref<1x16xf32, #tpu.memory_space<vmem>>, %arg10: memref<16x1xf32, #tpu.memory_space<vmem>>, %arg11: memref<16x128xbf16, #tpu.memory_space<vmem>>) attributes {dimension_semantics = [#tpu.dimension_semantics<arbitrary>, #tpu.dimension_semantics<arbitrary>], iteration_bounds = array<i64: 2, 1>, scalar_prefetch = 0 : i64, scratch_operands = 4 : i64, tpu.core_type = #tpu.core_type<tc>, window_params = [{pipeline_mode = #tpu.pipeline_mode<synchronous>, transform_indices = @transform_0, window_bounds = array<i64: 16, 8>}, {transform_indices = @transform_1, window_bounds = array<i64: 16, 16>}, {pipeline_mode = #tpu.pipeline_mode<synchronous>, transform_indices = @transform_2, window_bounds = array<i64: 8, 128>}, {pipeline_mode = #tpu.pipeline_mode<synchronous>, transform_indices = @transform_3, window_bounds = array<i64: 8, 128>}, {pipeline_mode = #tpu.pipeline_mode<synchronous>, transform_indices = @transform_4, window_bounds = array<i64: 128, 128>}, {transform_indices = @transform_5, window_bounds = array<i64: 16, 128>}]} {
    %c0 = arith.constant 0 : index
    %c0_0 = arith.constant 0 : index
    %0 = vector.load %arg4[%c0, %c0_0] : memref<8x128xf32, #tpu.memory_space<vmem>>, vector<8x128xf32>
    %c0_i32 = arith.constant 0 : i32
    %1 = arith.cmpi eq, %arg0, %c0_i32 : i32
    %c0_i32_1 = arith.constant 0 : i32
    %2 = arith.cmpi eq, %arg1, %c0_i32_1 : i32
    %3 = arith.andi %1, %2 : i1
    %4 = arith.extui %3 : i1 to i32
    %c0_i32_2 = arith.constant 0 : i32
    %5 = arith.cmpi ne, %4, %c0_i32_2 : i32
    scf.if %5 {
      %c0_23 = arith.constant 0 : index
      %c0_24 = arith.constant 0 : index
      %56 = vector.load %arg2[%c0_23, %c0_24] : memref<16x8xf32, #tpu.memory_space<vmem>>, vector<16x8xf32>
      %57 = arith.truncf %56 : vector<16x8xf32> to vector<16x8xbf16>
      %58 = vector.extract_strided_slice %0 {offsets = [0, 0], sizes = [1, 128], strides = [1, 1]} : vector<8x128xf32> to vector<1x128xf32>
      %59 = vector.extract_strided_slice %0 {offsets = [1, 0], sizes = [1, 128], strides = [1, 1]} : vector<8x128xf32> to vector<1x128xf32>
      %c0_25 = arith.constant 0 : index
      %c0_26 = arith.constant 0 : index
      %60 = vector.load %arg5[%c0_25, %c0_26] : memref<8x128xbf16, #tpu.memory_space<vmem>>, vector<8x128xbf16>
      %cst_27 = arith.constant dense<0.000000e+00> : vector<16x128xf32>
      %61 = tpu.matmul %57, %60, %cst_27 {dimension_numbers = #tpu.dot_dimension_numbers<[1], [0], [0], [1], [0, 0, 1, 1], [], []>} : vector<16x8xbf16>, vector<8x128xbf16>, vector<16x128xf32> -> vector<16x128xf32>
      %62 = arith.truncf %61 : vector<16x128xf32> to vector<16x128xbf16>
      %c0_28 = arith.constant 0 : index
      %c0_29 = arith.constant 0 : index
      %63 = vector.load %arg8[%c0_28, %c0_29] : memref<16x128xbf16, #tpu.memory_space<vmem>>, vector<16x128xbf16>
      tpu.vector_store %arg8[%c0_28, %c0_29], %62 {strides = array<i32>} : memref<16x128xbf16, #tpu.memory_space<vmem>>, vector<16x128xbf16>,
      "tpu.trace_start"() <{level = 10 : i32, message = "ch,nh->cn"}> : () -> ()
      %cst_30 = arith.constant dense<0.000000e+00> : vector<1x16xf32>
      %64 = tpu.matmul %58, %61, %cst_30 {dimension_numbers = #tpu.dot_dimension_numbers<[1], [1], [0], [0], [0, 0, 1, 0], [], []>} : vector<1x128xf32>, vector<16x128xf32>, vector<1x16xf32> -> vector<1x16xf32>
      "tpu.trace_stop"() : () -> ()
      %c0_31 = arith.constant 0 : index
      %c0_32 = arith.constant 0 : index
      %65 = vector.load %arg9[%c0_31, %c0_32] : memref<1x16xf32, #tpu.memory_space<vmem>>, vector<1x16xf32>
      tpu.vector_store %arg9[%c0_31, %c0_32], %64 {strides = array<i32>} : memref<1x16xf32, #tpu.memory_space<vmem>>, vector<1x16xf32>,
      %66 = vector.broadcast %59 : vector<1x128xf32> to vector<16x128xf32>
      %67 = arith.mulf %61, %66 : vector<16x128xf32>
      %cst_33 = arith.constant dense<0.000000e+00> : vector<16xf32>
      %68 = vector.multi_reduction <add>, %67, %cst_33 [1] : vector<16x128xf32> to vector<16xf32>
      %69 = vector.shape_cast %68 : vector<16xf32> to vector<16x1xf32>
      %c0_34 = arith.constant 0 : index
      %c0_35 = arith.constant 0 : index
      %70 = vector.load %arg10[%c0_34, %c0_35] : memref<16x1xf32, #tpu.memory_space<vmem>>, vector<16x1xf32>
      tpu.vector_store %arg10[%c0_34, %c0_35], %69 {strides = array<i32>} : memref<16x1xf32, #tpu.memory_space<vmem>>, vector<16x1xf32>,
    } else {
    }
    %c1_i32 = arith.constant 1 : i32
    %6 = arith.cmpi eq, %arg0, %c1_i32 : i32
    %c0_i32_3 = arith.constant 0 : i32
    %7 = arith.cmpi eq, %arg1, %c0_i32_3 : i32
    %8 = arith.andi %6, %7 : i1
    %9 = arith.extui %8 : i1 to i32
    %c0_i32_4 = arith.constant 0 : i32
    %10 = arith.cmpi ne, %9, %c0_i32_4 : i32
    scf.if %10 {
      %c0_23 = arith.constant 0 : index
      %c0_24 = arith.constant 0 : index
      %56 = vector.load %arg11[%c0_23, %c0_24] : memref<16x128xbf16, #tpu.memory_space<vmem>>, vector<16x128xbf16>
      %57 = vector.extract_strided_slice %0 {offsets = [3, 0], sizes = [1, 128], strides = [1, 1]} : vector<8x128xf32> to vector<1x128xf32>
      %58 = vector.extract_strided_slice %0 {offsets = [4, 0], sizes = [1, 128], strides = [1, 1]} : vector<8x128xf32> to vector<1x128xf32>
      %c0_25 = arith.constant 0 : index
      %c0_26 = arith.constant 0 : index
      %59 = vector.load %arg6[%c0_25, %c0_26] : memref<128x128xbf16, #tpu.memory_space<vmem>>, vector<128x128xbf16>
      %cst_27 = arith.constant dense<0.000000e+00> : vector<16x128xf32>
      %60 = tpu.matmul %56, %59, %cst_27 {dimension_numbers = #tpu.dot_dimension_numbers<[1], [0], [0], [1], [0, 0, 1, 1], [], []>} : vector<16x128xbf16>, vector<128x128xbf16>, vector<16x128xf32> -> vector<16x128xf32>
      %61 = arith.truncf %60 : vector<16x128xf32> to vector<16x128xbf16>
      %c0_28 = arith.constant 0 : index
      %c0_29 = arith.constant 0 : index
      %62 = vector.load %arg8[%c0_28, %c0_29] : memref<16x128xbf16, #tpu.memory_space<vmem>>, vector<16x128xbf16>
      tpu.vector_store %arg8[%c0_28, %c0_29], %61 {strides = array<i32>} : memref<16x128xbf16, #tpu.memory_space<vmem>>, vector<16x128xbf16>,
      "tpu.trace_start"() <{level = 10 : i32, message = "ch,nh->cn"}> : () -> ()
      %cst_30 = arith.constant dense<0.000000e+00> : vector<1x16xf32>
      %63 = tpu.matmul %57, %60, %cst_30 {dimension_numbers = #tpu.dot_dimension_numbers<[1], [1], [0], [0], [0, 0, 1, 0], [], []>} : vector<1x128xf32>, vector<16x128xf32>, vector<1x16xf32> -> vector<1x16xf32>
      "tpu.trace_stop"() : () -> ()
      %c0_31 = arith.constant 0 : index
      %c0_32 = arith.constant 0 : index
      %64 = vector.load %arg9[%c0_31, %c0_32] : memref<1x16xf32, #tpu.memory_space<vmem>>, vector<1x16xf32>
      tpu.vector_store %arg9[%c0_31, %c0_32], %63 {strides = array<i32>} : memref<1x16xf32, #tpu.memory_space<vmem>>, vector<1x16xf32>,
      %65 = vector.broadcast %58 : vector<1x128xf32> to vector<16x128xf32>
      %66 = arith.mulf %60, %65 : vector<16x128xf32>
      %cst_33 = arith.constant dense<0.000000e+00> : vector<16xf32>
      %67 = vector.multi_reduction <add>, %66, %cst_33 [1] : vector<16x128xf32> to vector<16xf32>
      %68 = vector.shape_cast %67 : vector<16xf32> to vector<16x1xf32>
      %c0_34 = arith.constant 0 : index
      %c0_35 = arith.constant 0 : index
      %69 = vector.load %arg10[%c0_34, %c0_35] : memref<16x1xf32, #tpu.memory_space<vmem>>, vector<16x1xf32>
      tpu.vector_store %arg10[%c0_34, %c0_35], %68 {strides = array<i32>} : memref<16x1xf32, #tpu.memory_space<vmem>>, vector<16x1xf32>,
    } else {
    }
    %c16_i32 = arith.constant 16 : i32
    %11 = arith.muli %arg1, %c16_i32 : i32
    %12 = tpu.assume_multiple %11, 16 : i32
    %c0_5 = arith.constant 0 : index
    %c0_6 = arith.constant 0 : index
    %13 = vector.load %arg3[%c0_5, %c0_6] : memref<16x16xi8, #tpu.memory_space<vmem>>, vector<16x16xi8>
    %14 = arith.sitofp %13 : vector<16x16xi8> to vector<16x16xf32>
    %cst = arith.constant 1.000000e+00 : f32
    %15 = vector.broadcast %cst : f32 to vector<16x16xf32>
    %16 = arith.subf %14, %15 : vector<16x16xf32>
    %cst_7 = arith.constant 1.000000e+30 : f32
    %17 = vector.broadcast %cst_7 : f32 to vector<16x16xf32>
    %18 = arith.mulf %16, %17 : vector<16x16xf32>
    %19 = arith.index_cast %12 : i32 to index
    %c0_8 = arith.constant 0 : index
    %20 = vector.load %arg10[%19, %c0_8] : memref<16x1xf32, #tpu.memory_space<vmem>>, vector<16x1xf32>
    %c0_9 = arith.constant 0 : index
    %c0_10 = arith.constant 0 : index
    %21 = vector.load %arg9[%c0_9, %c0_10] : memref<1x16xf32, #tpu.memory_space<vmem>>, vector<1x16xf32>
    %22 = vector.broadcast %20 : vector<16x1xf32> to vector<16x16xf32>
    %23 = vector.broadcast %21 : vector<1x16xf32> to vector<16x16xf32>
    %24 = arith.addf %22, %23 : vector<16x16xf32>
    %cst_11 = arith.constant 0.000000e+00 : f32
    %25 = vector.broadcast %cst_11 : f32 to vector<16x16xf32>
    %26 = arith.cmpf oge, %24, %25 : vector<16x16xf32>
    %cst_12 = arith.constant 2.000000e-01 : f32
    %27 = vector.broadcast %cst_12 : f32 to vector<16x16xf32>
    %28 = arith.mulf %27, %24 : vector<16x16xf32>
    %29 = arith.select %26, %24, %28 : vector<16x16xi1>, vector<16x16xf32>
    %30 = arith.addf %29, %18 : vector<16x16xf32>
    %cst_13 = arith.constant dense<0xFF800000> : vector<16xf32>
    %31 = vector.multi_reduction <maximumf>, %30, %cst_13 [1] : vector<16x16xf32> to vector<16xf32>
    %32 = vector.shape_cast %31 : vector<16xf32> to vector<16x1xf32>
    %33 = vector.broadcast %32 : vector<16x1xf32> to vector<16x16xf32>
    %34 = arith.subf %30, %33 : vector<16x16xf32>
    %35 = math.exp %34 : vector<16x16xf32>
    %cst_14 = arith.constant dense<0.000000e+00> : vector<16xf32>
    %36 = vector.multi_reduction <add>, %35, %cst_14 [1] : vector<16x16xf32> to vector<16xf32>
    %37 = vector.shape_cast %36 : vector<16xf32> to vector<16x1xf32>
    %38 = tpu.reciprocal %37 {approx = true} : vector<16x1xf32> -> vector<16x1xf32>
    %39 = vector.broadcast %38 : vector<16x1xf32> to vector<16x16xf32>
    %40 = arith.mulf %35, %39 : vector<16x16xf32>
    %c1_i32_15 = arith.constant 1 : i32
    %41 = arith.cmpi eq, %arg0, %c1_i32_15 : i32
    %42 = vector.extract_strided_slice %0 {offsets = [5, 0], sizes = [1, 128], strides = [1, 1]} : vector<8x128xf32> to vector<1x128xf32>
    %43 = vector.extract_strided_slice %0 {offsets = [2, 0], sizes = [1, 128], strides = [1, 1]} : vector<8x128xf32> to vector<1x128xf32>
    %44 = arith.select %41, %42, %43 : vector<1x128xf32>
    %45 = arith.truncf %40 : vector<16x16xf32> to vector<16x16xbf16>
    %c0_16 = arith.constant 0 : index
    %c0_17 = arith.constant 0 : index
    %46 = vector.load %arg8[%c0_16, %c0_17] : memref<16x128xbf16, #tpu.memory_space<vmem>>, vector<16x128xbf16>
    %cst_18 = arith.constant dense<0.000000e+00> : vector<16x128xf32>
    %47 = tpu.matmul %45, %46, %cst_18 {dimension_numbers = #tpu.dot_dimension_numbers<[1], [0], [0], [1], [0, 0, 1, 1], [], []>} : vector<16x16xbf16>, vector<16x128xbf16>, vector<16x128xf32> -> vector<16x128xf32>
    %48 = vector.broadcast %44 : vector<1x128xf32> to vector<16x128xf32>
    %49 = arith.addf %47, %48 : vector<16x128xf32>
    %c0_i32_19 = arith.constant 0 : i32
    %50 = arith.cmpi eq, %arg0, %c0_i32_19 : i32
    %51 = arith.extui %50 : i1 to i32
    %c0_i32_20 = arith.constant 0 : i32
    %52 = arith.cmpi ne, %51, %c0_i32_20 : i32
    scf.if %52 {
      %cst_23 = arith.constant 0.000000e+00 : f32
      %56 = vector.broadcast %cst_23 : f32 to vector<16x128xf32>
      %57 = arith.maximumf %49, %56 : vector<16x128xf32>
      %58 = arith.truncf %57 : vector<16x128xf32> to vector<16x128xbf16>
      %59 = arith.index_cast %12 : i32 to index
      %c0_24 = arith.constant 0 : index
      %60 = vector.load %arg11[%59, %c0_24] : memref<16x128xbf16, #tpu.memory_space<vmem>>, vector<16x128xbf16>
      tpu.vector_store %arg11[%59, %c0_24], %58 {strides = array<i32>} : memref<16x128xbf16, #tpu.memory_space<vmem>>, vector<16x128xbf16>,
    } else {
    }
    %c1_i32_21 = arith.constant 1 : i32
    %53 = arith.cmpi eq, %arg0, %c1_i32_21 : i32
    %54 = arith.extui %53 : i1 to i32
    %c0_i32_22 = arith.constant 0 : i32
    %55 = arith.cmpi ne, %54, %c0_i32_22 : i32
    scf.if %55 {
      %c0_23 = arith.constant 0 : index
      %c0_24 = arith.constant 0 : index
      %56 = vector.load %arg7[%c0_23, %c0_24] : memref<16x128xf32, #tpu.memory_space<vmem>>, vector<16x128xf32>
      tpu.vector_store %arg7[%c0_23, %c0_24], %49 {strides = array<i32>} : memref<16x128xf32, #tpu.memory_space<vmem>>, vector<16x128xf32>,
    } else {
    }
    return
  }
  func.func @transform_0(%arg0: i32, %arg1: i32) -> (i32, i32) {
    %c0_i32 = arith.constant 0 : i32
    %c0_i32_0 = arith.constant 0 : i32
    %c0_i32_1 = arith.constant 0 : i32
    return %c0_i32, %c0_i32_0 : i32, i32
  }
  func.func @transform_1(%arg0: i32, %arg1: i32) -> (i32, i32) {
    %c0_i32 = arith.constant 0 : i32
    %c0_i32_0 = arith.constant 0 : i32
    return %arg1, %c0_i32 : i32, i32
  }
  func.func @transform_2(%arg0: i32, %arg1: i32) -> (i32, i32) {
    %c0_i32 = arith.constant 0 : i32
    %c0_i32_0 = arith.constant 0 : i32
    %c0_i32_1 = arith.constant 0 : i32
    return %c0_i32, %c0_i32_0 : i32, i32
  }
  func.func @transform_3(%arg0: i32, %arg1: i32) -> (i32, i32) {
    %c0_i32 = arith.constant 0 : i32
    %c0_i32_0 = arith.constant 0 : i32
    %c0_i32_1 = arith.constant 0 : i32
    return %c0_i32, %c0_i32_0 : i32, i32
  }
  func.func @transform_4(%arg0: i32, %arg1: i32) -> (i32, i32) {
    %c0_i32 = arith.constant 0 : i32
    %c0_i32_0 = arith.constant 0 : i32
    %c0_i32_1 = arith.constant 0 : i32
    return %c0_i32, %c0_i32_0 : i32, i32
  }
  func.func @transform_5(%arg0: i32, %arg1: i32) -> (i32, i32) {
    %0 = arith.muli %arg0, %arg1 : i32
    %c0_i32 = arith.constant 0 : i32
    %c0_i32_0 = arith.constant 0 : i32
    return %0, %c0_i32 : i32, i32
  }
}

</mosaic_0001>

<llo_original>
// kernel: tpu_custom_call.1
$region0: #{tpu_custom_call.1}
  #allocation0 [shape = 'u32[]', space=smem, size = 0x4, offset = 0x4, fixed_abs, tag = 'smem constant byte address 0x4 - core index']
  #allocation1 [shape = 'u32[144,128]{1,0:T(1,128)}', space=vmem, size = 0x12000, scoped, tag = 'internal scratch']
  #allocation2 [shape = 'bf16[16,128]{1,0:T(16,128)(2,1)}', space=vmem, size = 0x1000, scoped, tag = 'scratch operand']
  #allocation3 [shape = 'f32[1,16]{1,0:T(1,128)}', space=vmem, size = 0x200, scoped, tag = 'scratch operand']
  #allocation4 [shape = 'f32[16,1]{1,0:T(8,128)}', space=vmem, size = 0x2000, scoped, tag = 'scratch operand']
  #allocation5 [shape = 'bf16[16,128]{1,0:T(16,128)(2,1)}', space=vmem, size = 0x1000, scoped, tag = 'scratch operand']
  %s0 = inlined_call_operand.vmem [shape: f32[16,8], index: 0, kind: input, shape index: {}]
  %s1 = inlined_call_operand.vmem [shape: s8[16,16], index: 1, kind: input, shape index: {}]
  %s2 = inlined_call_operand.vmem [shape: f32[8,128], index: 2, kind: input, shape index: {}]
  %s3 = inlined_call_operand.vmem [shape: bf16[8,128], index: 3, kind: input, shape index: {}]
  %s4 = inlined_call_operand.hbm [shape: bf16[128,128], index: 4, kind: input, shape index: {}]
  %s5 = inlined_call_operand.hbm [shape: f32[16,128], index: 5, kind: output, shape index: {}]
  %s6 = sld [smem:[#allocation0]]
  $region73: #{tpu_custom_call.1} parent=0
    _
  %s8 = ssub.s32 1, %s6
  %s9 = scalar_select 0, %s8, %s6
  $region1: #{tpu_custom_call.1} parent=0
    #allocation6 [shape = 'u8[32768]{0}', space=vmem, size = 0x8000, scoped, tag = 'input window, operand 4, single buffered']
    #allocation7 [shape = 's32[2]{0}', space=sflag, size = 0x8, scoped, tag = 'scoped memory for tpu_custom_call.1']
    #allocation8 [shape = 's32[2]{0}', space=sflag, size = 0x8, scoped, tag = 'scoped memory for tpu_custom_call.1']
    #allocation9 [shape = 'u8[16384]{0}', space=vmem, size = 0x4000, scoped, tag = 'output window, operand 0']
    %10 = vsyncpa [#allocation7], 0
    %11 = vsyncpa [#allocation8], 0
    %s12 = scalar_lea.sflag [#allocation8], 1
    %13 = vsyncpa %s12, 0
    loop: start=0, step=1, limit=4
    $region2: #{tpu_custom_call.1} parent=1 // loop_pre_header
      _
    $region3: #{tpu_custom_call.1} parent=1 // loop_header
      %s15 = sphi 0, %s19
      %p16 = scmp.ge.s32.totalorder %s15, 4
      %s22 = sphi 0, %s34
      %s23 = sphi 0, %s30
      %s24 = sphi 0, %s22
      %s25 = sphi 0, %s23
      %s26 = sphi 0, %s24
      %s27 = sphi 0, %s25
      %s35 = sphi 0, %s35
      %s37 = sphi 0, %s35
      %s38 = sphi 0, %s37
      %s52 = sphi 0, %s38
      %s58 = sphi 0, %s60
      %s61 = sphi 0, %s58
      %s62 = sphi 0, %s61
      %s78 = sphi 0, %s62
      %s82 = sphi 0, %s82
      %s84 = sphi 0, %s82
      %s85 = sphi 0, %s84
      %s99 = sphi 0, %s85
      %s103 = sphi 0, %s103
      %s105 = sphi 0, %s103
      %s106 = sphi 0, %s105
      %s120 = sphi 0, %s106
      %s124 = sphi 0, %s124
      %s126 = sphi 0, %s124
      %s127 = sphi 0, %s126
      %s141 = sphi 0, %s127
      %s149 = sphi 0, %s151
      %s152 = sphi 0, %s149
      %s153 = sphi 0, %s152
      %s169 = sphi 0, %s153
    $region4: #{tpu_custom_call.1} parent=1 // loop_header_branch
      %18 = sbr.rel (%p16) target = $region8
    $region5: #{tpu_custom_call.1} parent=1 // loop_body
      %s20 = ssub.s32 %s15, 1
      %s21 = ssub.s32 %s15, 2
      %s28 = sadd.s32 1, %s23
      %p29 = scmp.ge.s32.totalorder %s28, 1
      %s30 = scalar_select %p29, 0, %s28
      %s31 = sadd.s32 1, %s22
      %s32 = scalar_select %p29, %s31, %s22
      %p33 = scmp.ge.s32.totalorder %s32, 2
      %s34 = scalar_select %p33, 0, %s32
      %s36 = sadd.s32 %s35, 1
      %p39 = scmp.eq.s32.totalorder %s15, 1
      %p40 = scmp.ne.s32.totalorder %s35, %s37
      %p41 = scmp.eq.s32.totalorder %s15, 0
      %p42 = por %p40, %p41
      %p43 = scmp.ne.s32.totalorder %s35, %s37
      %p44 = scmp.eq.s32.totalorder %s20, 1
      %p45 = por %p43, %p44
      %p46 = scmp.ne.s32.totalorder %s37, %s38
      %p47 = scmp.eq.s32.totalorder %s20, 0
      %p48 = por %p46, %p47
      %p49 = scmp.ne.s32.totalorder %s37, %s38
      %p50 = scmp.eq.s32.totalorder %s21, 1
      %p51 = por %p49, %p50
      %p53 = scmp.ne.s32.totalorder %s38, %s52
      %p54 = scmp.eq.s32.totalorder %s21, 0
      %p55 = por %p53, %p54
      %s56 = ssub.s32 %s23, %s30
      %p57 = scmp.eq.s32.totalorder %s56, 0
      %s59 = sadd.s32 %s58, 1
      %s60 = scalar_select %p57, %s58, %s59
      %p63 = pneg %p57
      %p64 = scmp.eq.s32.totalorder %s15, 1
      %p65 = por %p63, %p64
      %p66 = scmp.ne.s32.totalorder %s58, %s61
      %p67 = scmp.eq.s32.totalorder %s15, 0
      %p68 = por %p66, %p67
      %p69 = scmp.ne.s32.totalorder %s58, %s61
      %p70 = scmp.eq.s32.totalorder %s20, 1
      %p71 = por %p69, %p70
      %p72 = scmp.ne.s32.totalorder %s61, %s62
      %p73 = scmp.eq.s32.totalorder %s20, 0
      %p74 = por %p72, %p73
      %p75 = scmp.ne.s32.totalorder %s61, %s62
      %p76 = scmp.eq.s32.totalorder %s21, 1
      %p77 = por %p75, %p76
      %p79 = scmp.ne.s32.totalorder %s62, %s78
      %p80 = scmp.eq.s32.totalorder %s21, 0
      %p81 = por %p79, %p80
      %s83 = sadd.s32 %s82, 1
      %p86 = scmp.eq.s32.totalorder %s15, 1
      %p87 = scmp.ne.s32.totalorder %s82, %s84
      %p88 = scmp.eq.s32.totalorder %s15, 0
      %p89 = por %p87, %p88
      %p90 = scmp.ne.s32.totalorder %s82, %s84
      %p91 = scmp.eq.s32.totalorder %s20, 1
      %p92 = por %p90, %p91
      %p93 = scmp.ne.s32.totalorder %s84, %s85
      %p94 = scmp.eq.s32.totalorder %s20, 0
      %p95 = por %p93, %p94
      %p96 = scmp.ne.s32.totalorder %s84, %s85
      %p97 = scmp.eq.s32.totalorder %s21, 1
      %p98 = por %p96, %p97
      %p100 = scmp.ne.s32.totalorder %s85, %s99
      %p101 = scmp.eq.s32.totalorder %s21, 0
      %p102 = por %p100, %p101
      %s104 = sadd.s32 %s103, 1
      %p107 = scmp.eq.s32.totalorder %s15, 1
      %p108 = scmp.ne.s32.totalorder %s103, %s105
      %p109 = scmp.eq.s32.totalorder %s15, 0
      %p110 = por %p108, %p109
      %p111 = scmp.ne.s32.totalorder %s103, %s105
      %p112 = scmp.eq.s32.totalorder %s20, 1
      %p113 = por %p111, %p112
      %p114 = scmp.ne.s32.totalorder %s105, %s106
      %p115 = scmp.eq.s32.totalorder %s20, 0
      %p116 = por %p114, %p115
      %p117 = scmp.ne.s32.totalorder %s105, %s106
      %p118 = scmp.eq.s32.totalorder %s21, 1
      %p119 = por %p117, %p118
      %p121 = scmp.ne.s32.totalorder %s106, %s120
      %p122 = scmp.eq.s32.totalorder %s21, 0
      %p123 = por %p121, %p122
      %s125 = sadd.s32 %s124, 1
      %p128 = scmp.eq.s32.totalorder %s15, 1
      %p129 = scmp.ne.s32.totalorder %s124, %s126
      %p130 = scmp.eq.s32.totalorder %s15, 0
      %p131 = por %p129, %p130
      %p132 = scmp.ne.s32.totalorder %s124, %s126
      %p133 = scmp.eq.s32.totalorder %s20, 1
      %p134 = por %p132, %p133
      %p135 = scmp.ne.s32.totalorder %s126, %s127
      %p136 = scmp.eq.s32.totalorder %s20, 0
      %p137 = por %p135, %p136
      %p138 = scmp.ne.s32.totalorder %s126, %s127
      %p139 = scmp.eq.s32.totalorder %s21, 1
      %p140 = por %p138, %p139
      %p142 = scmp.ne.s32.totalorder %s127, %s141
      %p143 = scmp.eq.s32.totalorder %s21, 0
      %p144 = por %p142, %p143
      %s145 = smul.u32 %s22, %s23
      %s146 = smul.u32 %s34, %s30
      %s147 = ssub.s32 %s145, %s146
      %p148 = scmp.eq.s32.totalorder %s147, 0
      %s150 = sadd.s32 %s149, 1
      %s151 = scalar_select %p148, %s149, %s150
      %p154 = pneg %p148
      %p155 = scmp.eq.s32.totalorder %s15, 1
      %p156 = por %p154, %p155
      %p157 = scmp.ne.s32.totalorder %s149, %s152
      %p158 = scmp.eq.s32.totalorder %s15, 0
      %p159 = por %p157, %p158
      %p160 = scmp.ne.s32.totalorder %s149, %s152
      %p161 = scmp.eq.s32.totalorder %s20, 1
      %p162 = por %p160, %p161
      %p163 = scmp.ne.s32.totalorder %s152, %s153
      %p164 = scmp.eq.s32.totalorder %s20, 0
      %p165 = por %p163, %p164
      %p166 = scmp.ne.s32.totalorder %s152, %s153
      %p167 = scmp.eq.s32.totalorder %s21, 1
      %p168 = por %p166, %p167
      %p170 = scmp.ne.s32.totalorder %s153, %s169
      %p171 = scmp.eq.s32.totalorder %s21, 0
      %p172 = por %p170, %p171
      %p173 = scmp.le.s32.totalorder 1, %s15
      %p174 = scmp.lt.s32.totalorder %s15, 3
      %p175 = pnand %p173, %p174
      %p176 = pneg %p175
      // Predicated region
      $region9: #{tpu_custom_call.1} parent=5 // pred_check
        _
      $region10: #{tpu_custom_call.1} parent=5 // pred_check_branch
        %178 = sbr.rel (%p175) target = $region12
      $region11: #{tpu_custom_call.1} parent=5 // pred_region
        %s179 = ssub.s32 %s15, 1
        // Predicated region
        $region13: #{tpu_custom_call.1} parent=11 // pred_check
          %p180 = pneg %p48
        $region14: #{tpu_custom_call.1} parent=11 // pred_check_branch
          %182 = sbr.rel (%p180) target = $region16
        $region15: #{tpu_custom_call.1} parent=11 // pred_region
          _
        $region16: #{tpu_custom_call.1} parent=11 // pred_fallthru
          _
        // Predicated region
        $region17: #{tpu_custom_call.1} parent=11 // pred_check
          %p183 = pneg %p74
        $region18: #{tpu_custom_call.1} parent=11 // pred_check_branch
          %185 = sbr.rel (%p183) target = $region20
        $region19: #{tpu_custom_call.1} parent=11 // pred_region
          %s186 = smul.u32 2, %s25
          %p187 = scmp.lt.s32.totalorder %s186, 1
          %s188 = scalar_select %p187, %s186, 1
          %s189 = smul.addr %s188, 2
          %s190 = scalar_lea.vmem %s1, %s189
          %s191 = smul.u32 2, %s25
        $region20: #{tpu_custom_call.1} parent=11 // pred_fallthru
          _
        // Predicated region
        $region21: #{tpu_custom_call.1} parent=11 // pred_check
          %p192 = pneg %p95
        $region22: #{tpu_custom_call.1} parent=11 // pred_check_branch
          %194 = sbr.rel (%p192) target = $region24
        $region23: #{tpu_custom_call.1} parent=11 // pred_region
          _
        $region24: #{tpu_custom_call.1} parent=11 // pred_fallthru
          _
        // Predicated region
        $region25: #{tpu_custom_call.1} parent=11 // pred_check
          %p195 = pneg %p116
        $region26: #{tpu_custom_call.1} parent=11 // pred_check_branch
          %197 = sbr.rel (%p195) target = $region28
        $region27: #{tpu_custom_call.1} parent=11 // pred_region
          _
        $region28: #{tpu_custom_call.1} parent=11 // pred_fallthru
          _
        // Predicated region
        $region29: #{tpu_custom_call.1} parent=11 // pred_check
          %p198 = pneg %p137
        $region30: #{tpu_custom_call.1} parent=11 // pred_check_branch
          %200 = sbr.rel (%p198) target = $region32
        $region31: #{tpu_custom_call.1} parent=11 // pred_region
          %s202 = ssub.s32 1024, 1024
          %203 = vsyncadd [#allocation7], %s202
          %s204 = sshll.u32 [#allocation6], 4
          %s205 = int_to_ptr.vmem [resolvable:$true] %s204
          %210 = dma.hbm_to_vmem [thread:$0]  %s4, 1024, %s205, [#allocation7], 64, 64, 4
        $region32: #{tpu_custom_call.1} parent=11 // pred_fallthru
          _
      $region12: #{tpu_custom_call.1} parent=5 // pred_fallthru
        _
      %p211 = scmp.lt.s32.totalorder %s15, 2
      // Predicated region
      $region33: #{tpu_custom_call.1} parent=5 // pred_check
        %p212 = pneg %p211
      $region34: #{tpu_custom_call.1} parent=5 // pred_check_branch
        %214 = sbr.rel (%p212) target = $region36
      $region35: #{tpu_custom_call.1} parent=5 // pred_region
        _
      $region36: #{tpu_custom_call.1} parent=5 // pred_fallthru
        _
      %p215 = scmp.le.s32.totalorder 1, %s15
      %p216 = scmp.lt.s32.totalorder %s15, 3
      %p217 = pnand %p215, %p216
      %p218 = pneg %p217
      // Predicated region
      $region37: #{tpu_custom_call.1} parent=5 // pred_check
        _
      $region38: #{tpu_custom_call.1} parent=5 // pred_check_branch
        %220 = sbr.rel (%p217) target = $region40
      $region39: #{tpu_custom_call.1} parent=5 // pred_region
        %s221 = ssub.s32 %s15, 1
        // Predicated region
        $region41: #{tpu_custom_call.1} parent=39 // pred_check
          %p222 = pneg %p137
        $region42: #{tpu_custom_call.1} parent=39 // pred_check_branch
          %224 = sbr.rel (%p222) target = $region44
        $region43: #{tpu_custom_call.1} parent=39 // pred_region
          %225 = dma.done [#allocation7], 1024
        $region44: #{tpu_custom_call.1} parent=39 // pred_fallthru
          _
        %p226 = pneg %p48
        %p227 = pneg %p45
        %s228 = smul.u32 2, %s25
        %p229 = scmp.lt.s32.totalorder %s228, 1
        %s230 = scalar_select %p229, %s228, 1
        %s231 = smul.addr %s230, 2
        %s232 = scalar_lea.vmem %s1, %s231
        %p233 = pneg %p74
        %p234 = pneg %p71
        %p235 = pneg %p95
        %p236 = pneg %p92
        %p237 = pneg %p116
        %p238 = pneg %p113
        %p239 = pneg %p137
        %p240 = pneg %p134
        %p241 = pneg %p165
        %p242 = pneg %p162
        %s243 = sand.u32 %s152, 1
        %s244 = scalar_lea.sflag [#allocation8], %s243
        %s245 = sand.u32 %s152, 1
        %s246 = smul.addr %s245, 16
        %s247 = scalar_lea.vmem [#allocation9], %s246
        %s248 = smul.u32 2, %s25
        %p249 = scmp.lt.s32.totalorder %s248, 1
        %s250 = scalar_select %p249, %s248, 1
        %s251 = smul.addr %s250, 2
        %s252 = scalar_lea.vmem %s1, %s251
        %s253 = smul.u32 2, %s25
        %s254 = smul.u32 %s24, %s25
        %s255 = smul.u32 2, %s254
        %v257 = vld [vmem:[%s2] sm:$0xff]
        %p258 = scmp.eq.s32.totalorder %s24, 0
        %p259 = scmp.eq.s32.totalorder %s25, 0
        %p260 = pnand %p258, %p259
        %p261 = pneg %p260
        // Predicated region
        $region45: #{tpu_custom_call.1} parent=39 // pred_check
          _
        $region46: #{tpu_custom_call.1} parent=39 // pred_check_branch
          %263 = sbr.rel (%p260) target = $region48
        $region47: #{tpu_custom_call.1} parent=39 // pred_region
          %v264 = vld [vmem:[%s0] sm:$0xff]
          %v265 = vld [vmem:[%s0 + $0x8] sm:$0xff]
          %v266 = vpack.c.bf16 %v265, %v264
          %v267 = vld [vmem:[%s3] sm:$0xf]
          %vm268 = vcmask 64512
          %v270 = vsel %vm268, %v266, 0
          %vm272 = vcmask 1043456
          %v274 = vsel %vm272, %v267, 0
          %276 = vmatprep.subr.bf16.mxu0 0
          %277 = vmatpush1.bf16.msra.mxu0 %v274
          %278 = vmatprep.subr.bf16.mxu0 0
          %279 = vmatpush1.bf16.msra.mxu0 0
          %280 = vmatprep.subr.bf16.mxu0 0
          %281 = vmatpush1.bf16.msra.mxu0 0
          %282 = vmatprep.subr.bf16.mxu0 0
          %283 = vmatpush1.bf16.msra.mxu0 0
          %284 = vmatprep.subr.bf16.mxu0 0
          %285 = vmatpush1.bf16.msra.mxu0 0
          %286 = vmatprep.subr.bf16.mxu0 0
          %287 = vmatpush1.bf16.msra.mxu0 0
          %288 = vmatprep.subr.bf16.mxu0 0
          %289 = vmatpush1.bf16.msra.mxu0 0
          %290 = vmatprep.subr.bf16.mxu0 0
          %291 = vmatpush1.bf16.msra.mxu0 0
          %292 = vmatprep.subr.bf16.mxu0 0
          %293 = vmatpush1.bf16.msra.mxu0 0
          %294 = vmatprep.subr.bf16.mxu0 0
          %295 = vmatpush1.bf16.msra.mxu0 0
          %296 = vmatprep.subr.bf16.mxu0 0
          %297 = vmatpush1.bf16.msra.mxu0 0
          %298 = vmatprep.subr.bf16.mxu0 0
          %299 = vmatpush1.bf16.msra.mxu0 0
          %300 = vmatprep.subr.bf16.mxu0 0
          %301 = vmatpush1.bf16.msra.mxu0 0
          %302 = vmatprep.subr.bf16.mxu0 0
          %303 = vmatpush1.bf16.msra.mxu0 0
          %304 = vmatprep.subr.bf16.mxu0 0
          %305 = vmatpush1.bf16.msra.mxu0 0
          %306 = vmatprep.subr.bf16.mxu0 0
          %307 = vmatpush1.bf16.msra.mxu0 0
          %308 = vmatprep.mubr.bf16.mxu0 0
          %309 = vmatmul.mubr.bf16.gmra.mrb[0].mxu0 %v270
          %v310 = vpop.f32.mrb[0].mxu0
          %v311 = vadd.f32 0.0, %v310
          %v312 = vpop.f32.mrb[0].mxu0
          %v313 = vpop.f32.mrb[0].mxu0
          %v314 = vadd.f32 0.0, %v313
          %v315 = vpop.f32.mrb[0].mxu0
          %316 = vdwg.mxu0
          %v317 = vpack.c.bf16 %v314, %v311
          %318 = vst [vmem:[#allocation2] sm:$0xff] %v317
          %319 = vmatprep.subr.mxu0 0.0
          %320 = vmatpush1.xpose.msra.mxu0 %v311
          %321 = vmatprep.subr.mxu0 0.0
          %322 = vmatpush1.xpose.msra.mxu0 %v314
          %323 = vmatprep.subr.mxu0 0.0
          %324 = vmatpush1.xpose.msra.mxu0 0.0
          %325 = vmatprep.subr.mxu0 0.0
          %326 = vmatpush1.xpose.msra.mxu0 0.0
          %327 = vmatprep.subr.mxu0 0.0
          %328 = vmatpush1.xpose.msra.mxu0 0.0
          %329 = vmatprep.subr.mxu0 0.0
          %330 = vmatpush1.xpose.msra.mxu0 0.0
          %331 = vmatprep.subr.mxu0 0.0
          %332 = vmatpush1.xpose.msra.mxu0 0.0
          %333 = vmatprep.subr.mxu0 0.0
          %334 = vmatpush1.xpose.msra.mxu0 0.0
          %335 = vmatprep.subr.mxu0 0.0
          %336 = vmatpush1.xpose.msra.mxu0 0.0
          %337 = vmatprep.subr.mxu0 0.0
          %338 = vmatpush1.xpose.msra.mxu0 0.0
          %339 = vmatprep.subr.mxu0 0.0
          %340 = vmatpush1.xpose.msra.mxu0 0.0
          %341 = vmatprep.subr.mxu0 0.0
          %342 = vmatpush1.xpose.msra.mxu0 0.0
          %343 = vmatprep.subr.mxu0 0.0
          %344 = vmatpush1.xpose.msra.mxu0 0.0
          %345 = vmatprep.subr.mxu0 0.0
          %346 = vmatpush1.xpose.msra.mxu0 0.0
          %347 = vmatprep.subr.mxu0 0.0
          %348 = vmatpush1.xpose.msra.mxu0 0.0
          %349 = vmatprep.subr.mxu0 0.0
          %350 = vmatpush1.xpose.msra.mxu0 0.0
          %351 = vmatprep.subr.mxu0 0.0
          %352 = vmatpush1.xpose.msra.mxu0 0.0
          %353 = vmatprep.subr.mxu0 0.0
          %354 = vmatpush1.xpose.msra.mxu0 0.0
          %355 = vmatprep.subr.mxu0 0.0
          %356 = vmatpush1.xpose.msra.mxu0 0.0
          %357 = vmatprep.subr.mxu0 0.0
          %358 = vmatpush1.xpose.msra.mxu0 0.0
          %359 = vmatprep.subr.mxu0 0.0
          %360 = vmatpush1.xpose.msra.mxu0 0.0
          %361 = vmatprep.subr.mxu0 0.0
          %362 = vmatpush1.xpose.msra.mxu0 0.0
          %363 = vmatprep.subr.mxu0 0.0
          %364 = vmatpush1.xpose.msra.mxu0 0.0
          %365 = vmatprep.subr.mxu0 0.0
          %366 = vmatpush1.xpose.msra.mxu0 0.0
          %367 = vmatprep.subr.mxu0 0.0
          %368 = vmatpush1.xpose.msra.mxu0 0.0
          %369 = vmatprep.subr.mxu0 0.0
          %370 = vmatpush1.xpose.msra.mxu0 0.0
          %371 = vmatprep.subr.mxu0 0.0
          %372 = vmatpush1.xpose.msra.mxu0 0.0
          %373 = vmatprep.subr.mxu0 0.0
          %374 = vmatpush1.xpose.msra.mxu0 0.0
          %375 = vmatprep.subr.mxu0 0.0
          %376 = vmatpush1.xpose.msra.mxu0 0.0
          %377 = vmatprep.subr.mxu0 0.0
          %378 = vmatpush1.xpose.msra.mxu0 0.0
          %379 = vmatprep.subr.mxu0 0.0
          %380 = vmatpush1.xpose.msra.mxu0 0.0
          %381 = vmatprep.subr.mxu0 0.0
          %382 = vmatpush1.xpose.msra.mxu0 0.0
          %383 = vmatprep.mubr.f32.mxu0 0.0
          %384 = vmatmul.mubr.f32.gmra.mrb[0].mxu0 %v257
          %v385 = vpop.f32.mrb[0].mxu0
          %v386 = vadd.f32 0.0, %v385
          %v387 = vpop.f32.mrb[0].mxu0
          %388 = vdwg.mxu0
          %vm389 = vcmask 122880
          %390 = vst.msk [vmem:[#allocation3] sm:$0x1] %vm389, %v386
          %v391 = vlaneseq
          %v392 = vshrl.u32 %v391, 7
          %v393 = vsub.s32 1, %v392
          %v394 = vrot.slane %v257, %v393
          %v395 = vmul.f32 %v311, %v394
          %v396 = vmul.f32 %v314, %v394
          %397 = vadd.xlane.f32.xlu0 %v395
          %v398 = vpop.xlane.xlu0 %397
          %399 = vadd.xlane.f32.xlu0 %v396
          %v400 = vpop.xlane.xlu0 %399
          %vm401 = vcmask 7168
          %402 = vst.msk [vmem:[#allocation4] sm:$0xff] %vm401, %v398
          %403 = vst.msk [vmem:[#allocation4 + $0x8] sm:$0xff] %vm401, %v400
        $region48: #{tpu_custom_call.1} parent=39 // pred_fallthru
          _
        %p404 = scmp.eq.s32.totalorder %s24, 1
        %p405 = pnand %p404, %p259
        %p406 = pneg %p405
        // Predicated region
        $region49: #{tpu_custom_call.1} parent=39 // pred_check
          _
        $region50: #{tpu_custom_call.1} parent=39 // pred_check_branch
          %408 = sbr.rel (%p405) target = $region52
        $region51: #{tpu_custom_call.1} parent=39 // pred_region
          %v409 = vld [vmem:[#allocation5] sm:$0xff]
          %v410 = vld [vmem:[#allocation6] sm:$0xf]
          %v411 = vld [vmem:[#allocation6 + $0x4] sm:$0xf]
          %v412 = vld [vmem:[#allocation6 + $0x8] sm:$0xf]
          %v413 = vld [vmem:[#allocation6 + $0xc] sm:$0xf]
          %v414 = vld [vmem:[#allocation6 + $0x10] sm:$0xf]
          %v415 = vld [vmem:[#allocation6 + $0x14] sm:$0xf]
          %v416 = vld [vmem:[#allocation6 + $0x18] sm:$0xf]
          %v417 = vld [vmem:[#allocation6 + $0x1c] sm:$0xf]
          %v418 = vld [vmem:[#allocation6 + $0x20] sm:$0xf]
          %v419 = vld [vmem:[#allocation6 + $0x24] sm:$0xf]
          %v420 = vld [vmem:[#allocation6 + $0x28] sm:$0xf]
          %v421 = vld [vmem:[#allocation6 + $0x2c] sm:$0xf]
          %v422 = vld [vmem:[#allocation6 + $0x30] sm:$0xf]
          %v423 = vld [vmem:[#allocation6 + $0x34] sm:$0xf]
          %v424 = vld [vmem:[#allocation6 + $0x38] sm:$0xf]
          %v425 = vld [vmem:[#allocation6 + $0x3c] sm:$0xf]
          %v442 = vunpack.c.l.b16 %v410
          %v443 = vunpack.c.l.b16 %v411
          %v444 = vunpack.c.l.b16 %v412
          %v445 = vunpack.c.l.b16 %v413
          %v446 = vunpack.c.l.b16 %v414
          %v447 = vunpack.c.l.b16 %v415
          %v448 = vunpack.c.l.b16 %v416
          %v449 = vunpack.c.l.b16 %v417
          %v450 = vunpack.c.l.b16 %v418
          %v451 = vunpack.c.l.b16 %v419
          %v452 = vunpack.c.l.b16 %v420
          %v453 = vunpack.c.l.b16 %v421
          %v454 = vunpack.c.l.b16 %v422
          %v455 = vunpack.c.l.b16 %v423
          %v456 = vunpack.c.l.b16 %v424
          %v457 = vunpack.c.l.b16 %v425
          %v458 = vpack.c.b16 %v443, %v442
          %v459 = vpack.c.b16 %v445, %v444
          %v460 = vpack.c.b16 %v447, %v446
          %v461 = vpack.c.b16 %v449, %v448
          %v462 = vpack.c.b16 %v451, %v450
          %v463 = vpack.c.b16 %v453, %v452
          %v464 = vpack.c.b16 %v455, %v454
          %v465 = vpack.c.b16 %v457, %v456
          %474 = vmatprep.subr.bf16.mxu0 0
          %475 = vmatpush1.bf16.msra.mxu0 %v458
          %476 = vmatprep.subr.bf16.mxu0 0
          %477 = vmatpush1.bf16.msra.mxu0 %v459
          %478 = vmatprep.subr.bf16.mxu0 0
          %479 = vmatpush1.bf16.msra.mxu0 %v460
          %480 = vmatprep.subr.bf16.mxu0 0
          %481 = vmatpush1.bf16.msra.mxu0 %v461
          %482 = vmatprep.subr.bf16.mxu0 0
          %483 = vmatpush1.bf16.msra.mxu0 %v462
          %484 = vmatprep.subr.bf16.mxu0 0
          %485 = vmatpush1.bf16.msra.mxu0 %v463
          %486 = vmatprep.subr.bf16.mxu0 0
          %487 = vmatpush1.bf16.msra.mxu0 %v464
          %488 = vmatprep.subr.bf16.mxu0 0
          %489 = vmatpush1.bf16.msra.mxu0 %v465
          %490 = vmatprep.subr.bf16.mxu0 0
          %491 = vmatpush1.bf16.msra.mxu0 0
          %492 = vmatprep.subr.bf16.mxu0 0
          %493 = vmatpush1.bf16.msra.mxu0 0
          %494 = vmatprep.subr.bf16.mxu0 0
          %495 = vmatpush1.bf16.msra.mxu0 0
          %496 = vmatprep.subr.bf16.mxu0 0
          %497 = vmatpush1.bf16.msra.mxu0 0
          %498 = vmatprep.subr.bf16.mxu0 0
          %499 = vmatpush1.bf16.msra.mxu0 0
          %500 = vmatprep.subr.bf16.mxu0 0
          %501 = vmatpush1.bf16.msra.mxu0 0
          %502 = vmatprep.subr.bf16.mxu0 0
          %503 = vmatpush1.bf16.msra.mxu0 0
          %504 = vmatprep.subr.bf16.mxu0 0
          %505 = vmatpush1.bf16.msra.mxu0 0
          %506 = vmatprep.mubr.bf16.mxu0 0
          %507 = vmatmul.mubr.bf16.gmra.mrb[0].mxu0 %v409
          %v508 = vpop.f32.mrb[0].mxu0
          %v509 = vadd.f32 0.0, %v508
          %v510 = vpop.f32.mrb[0].mxu0
          %v511 = vpop.f32.mrb[0].mxu0
          %v512 = vadd.f32 0.0, %v511
          %v513 = vpop.f32.mrb[0].mxu0
          %514 = vdwg.mxu0
          %v515 = vpack.c.bf16 %v512, %v509
          %516 = vst [vmem:[#allocation2] sm:$0xff] %v515
          %v518 = vrot.slane %v257, 3
          %520 = vmatprep.subr.mxu0 0.0
          %521 = vmatpush1.xpose.msra.mxu0 %v509
          %522 = vmatprep.subr.mxu0 0.0
          %523 = vmatpush1.xpose.msra.mxu0 %v512
          %524 = vmatprep.subr.mxu0 0.0
          %525 = vmatpush1.xpose.msra.mxu0 0.0
          %526 = vmatprep.subr.mxu0 0.0
          %527 = vmatpush1.xpose.msra.mxu0 0.0
          %528 = vmatprep.subr.mxu0 0.0
          %529 = vmatpush1.xpose.msra.mxu0 0.0
          %530 = vmatprep.subr.mxu0 0.0
          %531 = vmatpush1.xpose.msra.mxu0 0.0
          %532 = vmatprep.subr.mxu0 0.0
          %533 = vmatpush1.xpose.msra.mxu0 0.0
          %534 = vmatprep.subr.mxu0 0.0
          %535 = vmatpush1.xpose.msra.mxu0 0.0
          %536 = vmatprep.subr.mxu0 0.0
          %537 = vmatpush1.xpose.msra.mxu0 0.0
          %538 = vmatprep.subr.mxu0 0.0
          %539 = vmatpush1.xpose.msra.mxu0 0.0
          %540 = vmatprep.subr.mxu0 0.0
          %541 = vmatpush1.xpose.msra.mxu0 0.0
          %542 = vmatprep.subr.mxu0 0.0
          %543 = vmatpush1.xpose.msra.mxu0 0.0
          %544 = vmatprep.subr.mxu0 0.0
          %545 = vmatpush1.xpose.msra.mxu0 0.0
          %546 = vmatprep.subr.mxu0 0.0
          %547 = vmatpush1.xpose.msra.mxu0 0.0
          %548 = vmatprep.subr.mxu0 0.0
          %549 = vmatpush1.xpose.msra.mxu0 0.0
          %550 = vmatprep.subr.mxu0 0.0
          %551 = vmatpush1.xpose.msra.mxu0 0.0
          %552 = vmatprep.subr.mxu0 0.0
          %553 = vmatpush1.xpose.msra.mxu0 0.0
          %554 = vmatprep.subr.mxu0 0.0
          %555 = vmatpush1.xpose.msra.mxu0 0.0
          %556 = vmatprep.subr.mxu0 0.0
          %557 = vmatpush1.xpose.msra.mxu0 0.0
          %558 = vmatprep.subr.mxu0 0.0
          %559 = vmatpush1.xpose.msra.mxu0 0.0
          %560 = vmatprep.subr.mxu0 0.0
          %561 = vmatpush1.xpose.msra.mxu0 0.0
          %562 = vmatprep.subr.mxu0 0.0
          %563 = vmatpush1.xpose.msra.mxu0 0.0
          %564 = vmatprep.subr.mxu0 0.0
          %565 = vmatpush1.xpose.msra.mxu0 0.0
          %566 = vmatprep.subr.mxu0 0.0
          %567 = vmatpush1.xpose.msra.mxu0 0.0
          %568 = vmatprep.subr.mxu0 0.0
          %569 = vmatpush1.xpose.msra.mxu0 0.0
          %570 = vmatprep.subr.mxu0 0.0
          %571 = vmatpush1.xpose.msra.mxu0 0.0
          %572 = vmatprep.subr.mxu0 0.0
          %573 = vmatpush1.xpose.msra.mxu0 0.0
          %574 = vmatprep.subr.mxu0 0.0
          %575 = vmatpush1.xpose.msra.mxu0 0.0
          %576 = vmatprep.subr.mxu0 0.0
          %577 = vmatpush1.xpose.msra.mxu0 0.0
          %578 = vmatprep.subr.mxu0 0.0
          %579 = vmatpush1.xpose.msra.mxu0 0.0
          %580 = vmatprep.subr.mxu0 0.0
          %581 = vmatpush1.xpose.msra.mxu0 0.0
          %582 = vmatprep.subr.mxu0 0.0
          %583 = vmatpush1.xpose.msra.mxu0 0.0
          %584 = vmatprep.mubr.f32.mxu0 0.0
          %585 = vmatmul.mubr.f32.gmra.mrb[0].mxu0 %v518
          %v586 = vpop.f32.mrb[0].mxu0
          %v587 = vadd.f32 0.0, %v586
          %v588 = vpop.f32.mrb[0].mxu0
          %589 = vdwg.mxu0
          %vm590 = vcmask 122880
          %591 = vst.msk [vmem:[#allocation3] sm:$0x1] %vm590, %v587
          %v592 = vlaneseq
          %v593 = vshrl.u32 %v592, 7
          %v594 = vsub.s32 4, %v593
          %v595 = vrot.slane %v257, %v594
          %v596 = vmul.f32 %v509, %v595
          %v597 = vmul.f32 %v512, %v595
          %598 = vadd.xlane.f32.xlu0 %v596
          %v599 = vpop.xlane.xlu0 %598
          %600 = vadd.xlane.f32.xlu0 %v597
          %v601 = vpop.xlane.xlu0 %600
          %vm602 = vcmask 7168
          %603 = vst.msk [vmem:[#allocation4] sm:$0xff] %vm602, %v599
          %604 = vst.msk [vmem:[#allocation4 + $0x8] sm:$0xff] %vm602, %v601
        $region52: #{tpu_custom_call.1} parent=39 // pred_fallthru
          _
        %s605 = smul.u32 %s25, 16
        %v606 = vld [vmem:[%s252] sm:$0x3]
        %v607 = vld [vmem:[%s252 + $0x2] sm:$0x3]
        %v608 = vunpack.c.0.s8 %v606
        %v609 = vunpack.c.0.s8 %v607
        %v610 = vcvt.s32.f32 %v608
        %v611 = vcvt.s32.f32 %v609
        %v612 = vsub.f32 %v610, 1.0
        %v613 = vsub.f32 %v611, 1.0
        %v614 = vmul.f32 %v612, 1e+30
        %v615 = vmul.f32 %v613, 1e+30
        %s616 = scalar_lea.vmem [#allocation4], %s605
        %v617 = vld [vmem:[%s616] sm:$0xff]
        %v618 = vld [vmem:[%s616 + $0x8] sm:$0xff]
        %v619 = vld [vmem:[#allocation3] sm:$0x1]
        %621 = vset.pattern.permute.xlu0 0
        %622 = vperm.xlu0 %621, %v617
        %v623 = vpop.permute.xlu0 %622
        %626 = vset.pattern.permute.xlu0 0
        %627 = vperm.xlu0 %626, %v618
        %v628 = vpop.permute.xlu0 %627
        %v631 = vlaneseq
        %v632 = vshrl.u32 %v631, 7
        %v633 = vsub.s32 0, %v632
        %v634 = vrot.slane %v619, %v633
        %v636 = vadd.f32 %v623, %v634
        %v637 = vadd.f32 %v628, %v634
        %vm638 = vcmp.ge.f32.partialorder %v636, 0.0
        %vm639 = vcmp.ge.f32.partialorder %v637, 0.0
        %v640 = vmul.f32 %v636, 0.2
        %v641 = vmul.f32 %v637, 0.2
        %v642 = vsel %vm638, %v636, %v640
        %v643 = vsel %vm639, %v637, %v641
        %v644 = vadd.f32 %v642, %v614
        %v645 = vadd.f32 %v643, %v615
        %vm646 = vcmask 130048
        %v647 = vsel %vm646, %v644, -inf
        %648 = vmax.xlane.f32.xlu0 %v647
        %v649 = vpop.xlane.xlu0 %648
        %v650 = vsel %vm646, %v645, -inf
        %651 = vmax.xlane.f32.xlu0 %v650
        %v652 = vpop.xlane.xlu0 %651
        %v653 = vsub.f32 %v644, %v649
        %v654 = vsub.f32 %v645, %v652
        %v655 = vmul.f32 %v653, 1.442695
        %v656 = vpow.pop %v655
        %v657 = vmul.f32 %v654, 1.442695
        %v658 = vpow.pop %v657
        %v659 = vsel %vm646, %v656, 0.0
        %660 = vadd.xlane.f32.xlu0 %v659
        %v661 = vpop.xlane.xlu0 %660
        %v662 = vsel %vm646, %v658, 0.0
        %663 = vadd.xlane.f32.xlu0 %v662
        %v664 = vpop.xlane.xlu0 %663
        %v665 = vrcp.pop %v661
        %v666 = vrcp.pop %v664
        %v667 = vmul.f32 %v656, %v665
        %v668 = vmul.f32 %v658, %v666
        %s669 = scalar_select %p404, 1, 0
        %v670 = vstv %s669
        %vm671 = vcmp.eq.s32.totalorder %v670, 1
        %v673 = vrot.slane %v257, 5
        %v675 = vsel %vm671, %v257, %v673
        %v676 = vpack.c.bf16 %v668, %v667
        %v677 = vld [vmem:[#allocation2] sm:$0xff]
        %v678 = vlaneseq
        %v679 = vshrl.u32 %v678, 7
        %v680 = vsub.s32 5, %v679
        %v681 = vrot.slane %v675, %v680
        %v683 = vsel %vm646, %v676, 0
        %685 = vmatprep.subr.bf16.mxu0 0
        %686 = vmatpush1.bf16.msra.mxu0 %v677
        %687 = vmatprep.subr.bf16.mxu0 0
        %688 = vmatpush1.bf16.msra.mxu0 0
        %689 = vmatprep.subr.bf16.mxu0 0
        %690 = vmatpush1.bf16.msra.mxu0 0
        %691 = vmatprep.subr.bf16.mxu0 0
        %692 = vmatpush1.bf16.msra.mxu0 0
        %693 = vmatprep.subr.bf16.mxu0 0
        %694 = vmatpush1.bf16.msra.mxu0 0
        %695 = vmatprep.subr.bf16.mxu0 0
        %696 = vmatpush1.bf16.msra.mxu0 0
        %697 = vmatprep.subr.bf16.mxu0 0
        %698 = vmatpush1.bf16.msra.mxu0 0
        %699 = vmatprep.subr.bf16.mxu0 0
        %700 = vmatpush1.bf16.msra.mxu0 0
        %701 = vmatprep.subr.bf16.mxu0 0
        %702 = vmatpush1.bf16.msra.mxu0 0
        %703 = vmatprep.subr.bf16.mxu0 0
        %704 = vmatpush1.bf16.msra.mxu0 0
        %705 = vmatprep.subr.bf16.mxu0 0
        %706 = vmatpush1.bf16.msra.mxu0 0
        %707 = vmatprep.subr.bf16.mxu0 0
        %708 = vmatpush1.bf16.msra.mxu0 0
        %709 = vmatprep.subr.bf16.mxu0 0
        %710 = vmatpush1.bf16.msra.mxu0 0
        %711 = vmatprep.subr.bf16.mxu0 0
        %712 = vmatpush1.bf16.msra.mxu0 0
        %713 = vmatprep.subr.bf16.mxu0 0
        %714 = vmatpush1.bf16.msra.mxu0 0
        %715 = vmatprep.subr.bf16.mxu0 0
        %716 = vmatpush1.bf16.msra.mxu0 0
        %717 = vmatprep.mubr.bf16.mxu0 0
        %718 = vmatmul.mubr.bf16.gmra.mrb[0].mxu0 %v683
        %v719 = vpop.f32.mrb[0].mxu0
        %v720 = vadd.f32 %v681, %v719
        %v721 = vpop.f32.mrb[0].mxu0
        %v722 = vpop.f32.mrb[0].mxu0
        %v723 = vadd.f32 %v681, %v722
        %v724 = vpop.f32.mrb[0].mxu0
        %725 = vdwg.mxu0
        // Predicated region
        $region53: #{tpu_custom_call.1} parent=39 // pred_check
          %p726 = pneg %p258
        $region54: #{tpu_custom_call.1} parent=39 // pred_check_branch
          %728 = sbr.rel (%p726) target = $region56
        $region55: #{tpu_custom_call.1} parent=39 // pred_region
          %v729 = vmax.f32 %v720, 0.0
          %v730 = vmax.f32 %v723, 0.0
          %v731 = vpack.c.bf16 %v730, %v729
          %s732 = sshra.s32 %s605, 4
          %s733 = sand.u32 %s605, 15
          %s734 = smul.addr %s732, 8
          %s735 = scalar_lea.vmem [#allocation5], %s734
          %736 = vst [vmem:[%s735] sm:$0xff] %v731
        $region56: #{tpu_custom_call.1} parent=39 // pred_fallthru
          _
        // Predicated region
        $region57: #{tpu_custom_call.1} parent=39 // pred_check
          %p737 = pneg %p404
        $region58: #{tpu_custom_call.1} parent=39 // pred_check_branch
          %739 = sbr.rel (%p737) target = $region60
        $region59: #{tpu_custom_call.1} parent=39 // pred_region
          %740 = vst [vmem:[%s247] sm:$0xff] %v720
          %741 = vst [vmem:[%s247 + $0x8] sm:$0xff] %v723
        $region60: #{tpu_custom_call.1} parent=39 // pred_fallthru
          _
        %s742 = sand.u32 %s152, 1
        %s743 = scalar_lea.sflag [#allocation8], %s742
        %s744 = sand.u32 %s152, 1
        %s745 = smul.addr %s744, 16
        %s746 = scalar_lea.vmem [#allocation9], %s745
        // Predicated region
        $region61: #{tpu_custom_call.1} parent=39 // pred_check
          %p747 = pneg %p162
        $region62: #{tpu_custom_call.1} parent=39 // pred_check_branch
          %749 = sbr.rel (%p747) target = $region64
        $region63: #{tpu_custom_call.1} parent=39 // pred_region
          %s750 = smul.u32 %s24, %s25
          %s751 = smul.u32 2, %s750
          %s753 = ssub.s32 256, 256
          %754 = vsyncadd %s743, %s753
          %s755 = smul.addr %s751, 128
          %s756 = scalar_lea.hbm %s5, %s755
          %s757 = sshll.u32 %s746, 4
          %s758 = int_to_ptr.vmem [resolvable:$true] %s757
          %763 = dma.vmem_to_hbm [thread:$0]  %s758, 256, %s756, %s743, 128, 128, 8
        $region64: #{tpu_custom_call.1} parent=39 // pred_fallthru
          _
      $region40: #{tpu_custom_call.1} parent=5 // pred_fallthru
        _
      %p764 = scmp.le.s32.totalorder 2, %s15
      // Predicated region
      $region65: #{tpu_custom_call.1} parent=5 // pred_check
        %p765 = pneg %p764
      $region66: #{tpu_custom_call.1} parent=5 // pred_check_branch
        %767 = sbr.rel (%p765) target = $region68
      $region67: #{tpu_custom_call.1} parent=5 // pred_region
        %s768 = ssub.s32 %s15, 2
        // Predicated region
        $region69: #{tpu_custom_call.1} parent=67 // pred_check
          %p769 = pneg %p168
        $region70: #{tpu_custom_call.1} parent=67 // pred_check_branch
          %771 = sbr.rel (%p769) target = $region72
        $region71: #{tpu_custom_call.1} parent=67 // pred_region
          %s772 = sand.u32 %s153, 1
          %s773 = scalar_lea.sflag [#allocation8], %s772
          %s774 = sand.u32 %s153, 1
          %s775 = smul.addr %s774, 16
          %s776 = scalar_lea.vmem [#allocation9], %s775
          %777 = dma.done %s773, 256
        $region72: #{tpu_custom_call.1} parent=67 // pred_fallthru
          _
      $region68: #{tpu_custom_call.1} parent=5 // pred_fallthru
        _
    $region6: #{tpu_custom_call.1} parent=1 // loop_footer
      %s19 = sadd.s32 1, %s15
    $region7: #{tpu_custom_call.1} parent=1 // loop_footer_branch
      %14 = sbr.rel target = $region3
    $region8: #{tpu_custom_call.1} parent=1 // loop_exit
      _
    %778 = vsyncpa [#allocation7], 1
    %s779 = scalar_lea.sflag [#allocation7], 1
    %780 = vsyncpa %s779, 1
    %781 = vsyncpa [#allocation8], 1
    %s782 = scalar_lea.sflag [#allocation8], 1
    %783 = vsyncpa %s782, 1

</llo_original>
